<compile_context>
chip_gen: v5e
topology: v5e:2x2
jax: 0.10.0
libtpu: 0.0.40
codegen_flags: <defaults>
</compile_context>

<pallas_src>
import jax
import jax.numpy as jnp
from jax.experimental import pallas as pl
from jax.experimental.pallas import tpu as pltpu


def _linear_add_relu_kernel(x_ref, slab_ref, o_ref):
    # x_ref   : SMEM (B*K,) f32 scalars (flattened x1, row-major)
    # slab_ref: VMEM (K+1, N) f32; rows 0..K-1 = W^T, row K = bias + y
    # o_ref   : VMEM (B, N) f32
    kp1, _ = slab_ref.shape
    K = kp1 - 1
    B = x_ref.shape[0] // K

    base = slab_ref[K:K + 1, :]                      # (1, N) folded bias + y
    rows = []
    for b in range(B):                               # static unroll (tiny B)
        acc = base
        for k in range(K):                           # static unroll, K = 4
            # scalar (SMEM) * row of W^T -> VPU FMA, no MXU, no cross-lane work
            acc = acc + x_ref[b * K + k] * slab_ref[k:k + 1, :]
        rows.append(jnp.maximum(acc, 0.0))           # ReLU per row, (1, N)

    result = rows[0] if B == 1 else jnp.concatenate(rows, axis=0)
    o_ref[...] = result.astype(o_ref.dtype)          # ONE bulk store


def model_forward(x1, weight, bias, y_row):
    """x1: [B, K] f32, weight: [N, K] f32 (torch layout), bias: [N] f32,
    y_row: [1, N] f32 (the module's free global `y`)."""
    B, K = x1.shape
    N = weight.shape[0]

    # Host-side (XLA) prep — constants folded once, outside the kernel:
    base_row = (bias.reshape(1, N) + y_row).astype(jnp.float32)   # bias + y
    slab = jnp.concatenate([weight.T.astype(jnp.float32), base_row], axis=0)
    x_flat = x1.reshape(B * K).astype(jnp.float32)

    ce = pl.CostEstimate(
        flops=2 * B * K * N + 2 * B * N,
        transcendentals=0,
        bytes_accessed=4 * (B * K + (K + 1) * N + B * N),
    )
    return pl.pallas_call(
        _linear_add_relu_kernel,
        out_shape=jax.ShapeDtypeStruct((B, N), jnp.float32),
        in_specs=[
            pl.BlockSpec(memory_space=pltpu.MemorySpace.SMEM),  # x1 flat scalars
            pl.BlockSpec(memory_space=pltpu.MemorySpace.VMEM),  # packed W^T + base
        ],
        out_specs=pl.BlockSpec(memory_space=pltpu.MemorySpace.VMEM),
        cost_estimate=ce,
    )(x_flat, slab)


if __name__ == "__main__":
    key = jax.random.PRNGKey(0)
    k_x, k_b, k_y = jax.random.split(key, 3)

    # x1 = torch.randn(1, 4)
    x1 = jax.random.normal(k_x, (1, 4), dtype=jnp.float32)

    # Fixed Linear weight from the module's __init__ (torch layout [out, in]).
    weight = jnp.array(
        [[-1.2, 4.2, 5.2, 0.2],
         [2.5, 2.4, 10.0, 1.8],
         [-1.5, -0.5, 2.7, -3.0],
         [1.2, -3.2, 1.5, 1.3]], dtype=jnp.float32)

    # Deterministic stand-in for torch's default bias init U(-1/sqrt(4), 1/sqrt(4)).
    bias = jax.random.uniform(k_b, (4,), dtype=jnp.float32, minval=-0.5, maxval=0.5)

    # TODO(synk): `y` is a free global in the original module; modeled here as a
    # deterministic (1, 4) tensor added (with broadcasting) before the ReLU.
    y = jax.random.normal(k_y, (1, 4), dtype=jnp.float32)

    out = model_forward(x1, weight, bias, y)
    out = jax.block_until_ready(out)

    # Reference check in plain JAX (torch.nn.Linear semantics: x @ W^T + b).
    ref = jnp.maximum(x1 @ weight.T + bias.reshape(1, 4) + y, 0.0)
    assert out.shape == (1, 4)
    assert jnp.allclose(out, ref, atol=1e-5, rtol=1e-5)

    print("KERNEL_OK")
</pallas_src>

<mosaic_0001>
module attributes {stable_mosaic.version = 11 : i64} {
  func.func @_linear_add_relu_kernel(%arg0: memref<4xf32, #tpu.memory_space<smem>>, %arg1: memref<5x4xf32, #tpu.memory_space<vmem>>, %arg2: memref<1x4xf32, #tpu.memory_space<vmem>>) attributes {dimension_semantics = [], scalar_prefetch = 0 : i64, scratch_operands = 0 : i64, tpu.core_type = #tpu.core_type<tc>} {
    %c4 = arith.constant 4 : index
    %c0 = arith.constant 0 : index
    %0 = vector.load %arg1[%c4, %c0] : memref<5x4xf32, #tpu.memory_space<vmem>>, vector<1x4xf32>
    %c0_0 = arith.constant 0 : index
    %1 = memref.load %arg0[%c0_0] : memref<4xf32, #tpu.memory_space<smem>>
    %c0_1 = arith.constant 0 : index
    %c0_2 = arith.constant 0 : index
    %2 = vector.load %arg1[%c0_1, %c0_2] : memref<5x4xf32, #tpu.memory_space<vmem>>, vector<1x4xf32>
    %3 = vector.broadcast %1 : f32 to vector<1x4xf32>
    %4 = arith.mulf %3, %2 : vector<1x4xf32>
    %5 = arith.addf %0, %4 : vector<1x4xf32>
    %c1 = arith.constant 1 : index
    %6 = memref.load %arg0[%c1] : memref<4xf32, #tpu.memory_space<smem>>
    %c1_3 = arith.constant 1 : index
    %c0_4 = arith.constant 0 : index
    %7 = vector.load %arg1[%c1_3, %c0_4] : memref<5x4xf32, #tpu.memory_space<vmem>>, vector<1x4xf32>
    %8 = vector.broadcast %6 : f32 to vector<1x4xf32>
    %9 = arith.mulf %8, %7 : vector<1x4xf32>
    %10 = arith.addf %5, %9 : vector<1x4xf32>
    %c2 = arith.constant 2 : index
    %11 = memref.load %arg0[%c2] : memref<4xf32, #tpu.memory_space<smem>>
    %c2_5 = arith.constant 2 : index
    %c0_6 = arith.constant 0 : index
    %12 = vector.load %arg1[%c2_5, %c0_6] : memref<5x4xf32, #tpu.memory_space<vmem>>, vector<1x4xf32>
    %13 = vector.broadcast %11 : f32 to vector<1x4xf32>
    %14 = arith.mulf %13, %12 : vector<1x4xf32>
    %15 = arith.addf %10, %14 : vector<1x4xf32>
    %c3 = arith.constant 3 : index
    %16 = memref.load %arg0[%c3] : memref<4xf32, #tpu.memory_space<smem>>
    %c3_7 = arith.constant 3 : index
    %c0_8 = arith.constant 0 : index
    %17 = vector.load %arg1[%c3_7, %c0_8] : memref<5x4xf32, #tpu.memory_space<vmem>>, vector<1x4xf32>
    %18 = vector.broadcast %16 : f32 to vector<1x4xf32>
    %19 = arith.mulf %18, %17 : vector<1x4xf32>
    %20 = arith.addf %15, %19 : vector<1x4xf32>
    %cst = arith.constant 0.000000e+00 : f32
    %21 = vector.broadcast %cst : f32 to vector<1x4xf32>
    %22 = arith.maximumf %20, %21 : vector<1x4xf32>
    %c0_9 = arith.constant 0 : index
    %c0_10 = arith.constant 0 : index
    %23 = vector.load %arg2[%c0_9, %c0_10] : memref<1x4xf32, #tpu.memory_space<vmem>>, vector<1x4xf32>
    tpu.vector_store %arg2[%c0_9, %c0_10], %22 {strides = array<i32>} : memref<1x4xf32, #tpu.memory_space<vmem>>, vector<1x4xf32>,
    return
  }
}

</mosaic_0001>

<llo_original>
// kernel: tpu_custom_call.1
$region0: #{tpu_custom_call.1}
  #allocation0 [shape = 'u32[]', space=smem, size = 0x4, offset = 0x4, fixed_abs, tag = 'smem constant byte address 0x4 - core index']
  #allocation1 [shape = 'u32[72,128]{1,0:T(1,128)}', space=vmem, size = 0x9000, scoped, tag = 'internal scratch']
  %s0 = inlined_call_operand.vmem [shape: f32[4], index: 0, kind: input, shape index: {}]
  %s1 = inlined_call_operand.vmem [shape: f32[5,4], index: 1, kind: input, shape index: {}]
  %s2 = inlined_call_operand.hbm [shape: f32[1,4], index: 2, kind: output, shape index: {}]
  %s3 = sld [smem:[#allocation0]]
  $region22: #{tpu_custom_call.1} parent=0
    _
  %s5 = ssub.s32 1, %s3
  %s6 = scalar_select 0, %s5, %s3
  $region1: #{tpu_custom_call.1} parent=0
    #allocation2 [shape = 'u8[512]{0}', space=smem, size = 0x200, scoped, tag = 'input window, operand 0, single buffered']
    #allocation3 [shape = 's32[1]{0}', space=sflag, size = 0x4, scoped, tag = 'scoped memory for tpu_custom_call.1']
    #allocation4 [shape = 's32[1]{0}', space=sflag, size = 0x4, scoped, tag = 'scoped memory for tpu_custom_call.1']
    #allocation5 [shape = 'u8[512]{0}', space=vmem, size = 0x400, scoped, tag = 'output window, operand 0, single buffered']
    %7 = vsyncpa [#allocation4], 0
    %8 = vsyncpa [#allocation3], 0
    // Predicated region
    $region2: #{tpu_custom_call.1} parent=1 // pred_check
      _
    $region3: #{tpu_custom_call.1} parent=1 // pred_check_branch
      %10 = sbr.rel (0) target = $region5
    $region4: #{tpu_custom_call.1} parent=1 // pred_region
      %12 = vsyncadd [#allocation4], 0
      %s14 = sshll.u32 %s0, 4
      %s15 = int_to_ptr.vmem [resolvable:$true] %s14
      %17 = dma.vmem_to_smem %s15, 16, [#allocation2], [#allocation4]
    $region5: #{tpu_custom_call.1} parent=1 // pred_fallthru
      _
    // Predicated region
    $region6: #{tpu_custom_call.1} parent=1 // pred_check
      _
    $region7: #{tpu_custom_call.1} parent=1 // pred_check_branch
      %19 = sbr.rel (0) target = $region9
    $region8: #{tpu_custom_call.1} parent=1 // pred_region
      _
    $region9: #{tpu_custom_call.1} parent=1 // pred_fallthru
      _
    // Predicated region
    $region10: #{tpu_custom_call.1} parent=1 // pred_check
      _
    $region11: #{tpu_custom_call.1} parent=1 // pred_check_branch
      %21 = sbr.rel (0) target = $region13
    $region12: #{tpu_custom_call.1} parent=1 // pred_region
      %23 = dma.done [#allocation4], 16
    $region13: #{tpu_custom_call.1} parent=1 // pred_fallthru
      _
    %24 = sfence
    %v25 = vld [vmem:[%s1 + $0x4] sm:$0x1]
    %s26 = sld [smem:[#allocation2]]
    %v27 = vld [vmem:[%s1] sm:$0x1]
    %v28 = vstv %s26
    %v29 = vmul.f32 %v28, %v27
    %v30 = vadd.f32 %v25, %v29
    %s31 = sld [smem:[#allocation2 + $0x1]]
    %v32 = vld [vmem:[%s1 + $0x1] sm:$0x1]
    %v33 = vstv %s31
    %v34 = vmul.f32 %v33, %v32
    %v35 = vadd.f32 %v30, %v34
    %s36 = sld [smem:[#allocation2 + $0x2]]
    %v37 = vld [vmem:[%s1 + $0x2] sm:$0x1]
    %v38 = vstv %s36
    %v39 = vmul.f32 %v38, %v37
    %v40 = vadd.f32 %v35, %v39
    %s41 = sld [smem:[#allocation2 + $0x3]]
    %v42 = vld [vmem:[%s1 + $0x3] sm:$0x1]
    %v43 = vstv %s41
    %v44 = vmul.f32 %v43, %v42
    %v45 = vadd.f32 %v40, %v44
    %v46 = vmax.f32 %v45, 0.0
    %vm47 = vcmask 24576
    %48 = vst.msk [vmem:[#allocation5] sm:$0x1] %vm47, %v46
    // Predicated region
    $region14: #{tpu_custom_call.1} parent=1 // pred_check
      _
    $region15: #{tpu_custom_call.1} parent=1 // pred_check_branch
      %50 = sbr.rel (0) target = $region17
    $region16: #{tpu_custom_call.1} parent=1 // pred_region
      %52 = vsyncadd [#allocation3], 0
      %s54 = sshll.u32 [#allocation5], 4
      %s55 = int_to_ptr.vmem [resolvable:$true] %s54
      %s56 = sshll.u32 %s2, 4
      %s57 = int_to_ptr.hbm [resolvable:$true] %s56
      %59 = dma.vmem_to_hbm [thread:$0]  %s55, 16, %s57, [#allocation3]
    $region17: #{tpu_custom_call.1} parent=1 // pred_fallthru
      _
    // Predicated region
    $region18: #{tpu_custom_call.1} parent=1 // pred_check
      _
    $region19: #{tpu_custom_call.1} parent=1 // pred_check_branch
      %61 = sbr.rel (0) target = $region21
    $region20: #{tpu_custom_call.1} parent=1 // pred_region
      %63 = dma.done [#allocation3], 16
    $region21: #{tpu_custom_call.1} parent=1 // pred_fallthru
      _
    %64 = vsyncpa [#allocation3], 1
    %65 = vsyncpa [#allocation4], 1

</llo_original>
